<compile_context>
chip_gen: v6e
topology: v6e:2x2x1
jax: 0.10.0
libtpu: 0.0.40
codegen_flags: <defaults>
</compile_context>

<pallas_src>
import functools

import jax
import jax.numpy as jnp
from jax.experimental import pallas as pl
from jax.experimental.pallas import tpu as pltpu


def _focal_ce_kernel(score_ref, target_ref, sum_ref, cnt_ref, *,
                     ignore_label, num_classes, rows, hw):
    """One (image, chunk, row-tile) step of the masked CE reduction.

    score_ref:  (1, C, rows, 128)  logits block (input dtype, upcast inside)
    target_ref: (1, 1, rows, 128)  integer class ids (int8/int16/int32)
    sum_ref/cnt_ref: (1, 1, 8, 128) f32 per-(image, chunk) accumulators,
                     resident across the row-tile grid axis.
    """
    p = pl.program_id(1)
    j = pl.program_id(2)

    @pl.when(j == 0)
    def _():
        sum_ref[...] = jnp.zeros_like(sum_ref)
        cnt_ref[...] = jnp.zeros_like(cnt_ref)

    t = target_ref[0, 0].astype(jnp.int32)                       # (rows, 128)

    # Position mask: global pixel index < HW.  Handles the ragged last block
    # and the duplicated (clamped) blocks of the megacore pixel-chunk axis.
    r_idx = jax.lax.broadcasted_iota(jnp.int32, (rows, 128), 0)
    l_idx = jax.lax.broadcasted_iota(jnp.int32, (rows, 128), 1)
    row0 = (p * pl.num_programs(2) + j) * rows
    pix = (row0 + r_idx) * 128 + l_idx
    valid = (pix < hw) & (t != ignore_label)

    # Pass 1: running max over the class axis -- C-1 full-vreg VPU maximums.
    m = score_ref[0, 0].astype(jnp.float32)
    for k in range(1, num_classes):
        m = jnp.maximum(m, score_ref[0, k].astype(jnp.float32))

    # Pass 2: exp-sum for logsumexp + masked select of the picked logit.
    # All ops here are dense (rows, 128) compare/select/add/exp -- no sublane
    # slices, no (T, C) one-hot materialization.
    s = jnp.zeros((rows, 128), jnp.float32)
    picked = jnp.zeros((rows, 128), jnp.float32)
    for k in range(num_classes):
        zk = score_ref[0, k].astype(jnp.float32)
        s = s + jnp.exp(zk - m)
        picked = picked + jnp.where(t == k, zk, 0.0)

    ce = (m - picked) + jnp.log(s)                     # per-pixel CE (rows,128)
    loss = jnp.where(valid, ce, 0.0)
    cnt = jnp.where(valid, 1.0, 0.0)

    # Fold the rows axis into the resident (8, 128) accumulators: pure VALU
    # adds over 8-aligned sublane slices (no XLU reduce, no big scratch).
    def _fold_rows(v):
        acc = v[0:8]
        for b in range(1, rows // 8):
            acc = acc + v[b * 8:(b + 1) * 8]
        return acc

    sum_ref[...] += _fold_rows(loss)
    cnt_ref[...] += _fold_rows(cnt)


def _ce_loss_mean(score_nchw, target_nhw, *, ignore_label=-1,
                  block_bytes=2 * 1024 * 1024, max_rows=None):
    """nn.CrossEntropyLoss(weight=None, ignore_index=ignore_label) semantics
    (mean over non-ignored pixels) via a Pallas reduction kernel."""
    N, C, H, W = score_nchw.shape
    HW = H * W
    itemsize = jnp.dtype(score_nchw.dtype).itemsize

    x = score_nchw.reshape(N, C, HW)       # pure reshape of contiguous NCHW
    t = target_nhw.reshape(N, 1, HW)

    # Keep R (= padded_HW / 128) a multiple of 8 so row tiles are vreg-aligned.
    # Typical segmentation shapes (H, W multiples of 32) take the zero-copy
    # path; only odd shapes pay a one-off pad of the last axis.
    HW_pad = int(pl.cdiv(HW, 1024)) * 1024
    if HW_pad != HW:
        x = jnp.pad(x, ((0, 0), (0, 0), (0, HW_pad - HW)))
        t = jnp.pad(t, ((0, 0), (0, 0), (0, HW_pad - HW)),
                    constant_values=ignore_label)
    R = HW_pad // 128
    x = x.reshape(N, C, R, 128)

    # Row-tile size: big enough to amortize the ~0.35us per-grid-step overhead
    # but comfortably inside the scoped-VMEM budget on every generation.
    rows = max(8, block_bytes // (C * 128 * itemsize))
    if max_rows is not None:
        rows = min(rows, max_rows)
    rows = min(rows, R)
    if rows < R:
        # 32-aligned partial tiles are safe for f32/bf16 scores + int8 targets.
        rows = min(R, max(32, (rows // 32) * 32))

    # Stream narrow integer targets at native width when alignment allows
    # (saves HBM bandwidth); otherwise fall back to int32.
    tgt_dt = t.dtype
    if tgt_dt == jnp.int8 and rows % 32 == 0:
        pass
    elif tgt_dt == jnp.int16 and rows % 16 == 0:
        pass
    else:
        tgt_dt = jnp.int32
    t = t.reshape(N, 1, R, 128).astype(tgt_dt)

    nrb = int(pl.cdiv(R, rows))            # row blocks per image
    P = 2 if nrb >= 2 else 1               # pixel-chunk axis for v7x megacore
    J = int(pl.cdiv(nrb, P))               # row blocks per chunk

    def _in_idx(n, p, j):
        # Clamp so the DMA never starts fully out of bounds; the duplicated
        # tail blocks this creates are masked inside the kernel.
        rb = jnp.minimum(p * J + j, nrb - 1)
        return (n, 0, rb, 0)

    def _out_idx(n, p, j):
        return (n, p, 0, 0)

    kernel = functools.partial(_focal_ce_kernel, ignore_label=ignore_label,
                               num_classes=C, rows=rows, hw=HW)

    # Explicit scoped-VMEM budget: 2x double-buffered inputs + outputs + an
    # allowance for in-kernel f32 temporaries, clamped to 48 MiB (safe on
    # v7x's 64 MiB/TC as well as v5e/v6e).
    score_blk = C * rows * 128 * itemsize
    tgt_blk = rows * 128 * jnp.dtype(tgt_dt).itemsize
    est = 2 * (score_blk + tgt_blk) + 4 * (8 * 128 * 4) + 12 * rows * 128 * 4
    vmem_limit = int(min(max(2 * est, 16 * 1024 * 1024), 48 * 1024 * 1024))

    sums, cnts = pl.pallas_call(
        kernel,
        out_shape=(
            jax.ShapeDtypeStruct((N, P, 8, 128), jnp.float32),
            jax.ShapeDtypeStruct((N, P, 8, 128), jnp.float32),
        ),
        grid_spec=pltpu.PrefetchScalarGridSpec(
            num_scalar_prefetch=0,
            grid=(N, P, J),
            in_specs=[
                pl.BlockSpec((1, C, rows, 128), _in_idx),
                pl.BlockSpec((1, 1, rows, 128), _in_idx),
            ],
            out_specs=[
                pl.BlockSpec((1, 1, 8, 128), _out_idx),
                pl.BlockSpec((1, 1, 8, 128), _out_idx),
            ],
        ),
        compiler_params=pltpu.CompilerParams(
            dimension_semantics=("parallel", "parallel", "arbitrary"),
            vmem_limit_bytes=vmem_limit),
    )(x, t)

    # NaN if every pixel is ignored -- same behavior as the PyTorch reference.
    return jnp.sum(sums) / jnp.sum(cnts)


def focal_loss(score, target, *, gamma=0.0, alpha=None, ignore_label=-1,
               block_bytes=2 * 1024 * 1024, max_rows=None):
    """Mirrors FocalLoss.forward semantics."""
    if not isinstance(score, (list, tuple)):
        score = [score]
    balance_weights = [0.4, 1.0]
    sb_weights = 1.0

    # TODO(synk): fuse the two-prediction balance_weights path into a single
    # pallas_call so the target stream is DMA'd only once per tile.
    def _fwd(x):
        ce = _ce_loss_mean(x, target, ignore_label=ignore_label,
                           block_bytes=block_bytes, max_rows=max_rows)
        pt = jnp.exp(-ce)
        fl = jnp.power(1.0 - pt, gamma)
        if alpha is not None:
            return alpha * fl
        return fl

    if len(balance_weights) == len(score):
        return sum(w * _fwd(x) for w, x in zip(balance_weights, score))
    elif len(score) == 1:
        return sb_weights * _fwd(score[0])
    else:
        raise ValueError('lengths of prediction and target are not identical!')


def _reference_focal_loss(score, target, *, gamma, alpha, ignore_label):
    """Pure-JAX reference for correctness checking."""
    if not isinstance(score, (list, tuple)):
        score = [score]

    def _ce(x):
        N, C, H, W = x.shape
        z = jnp.transpose(x, (0, 2, 3, 1)).reshape(-1, C).astype(jnp.float32)
        t = target.reshape(-1).astype(jnp.int32)
        lse = jax.scipy.special.logsumexp(z, axis=1)
        picked = jnp.take_along_axis(
            z, jnp.clip(t, 0, C - 1)[:, None], axis=1)[:, 0]
        ce = lse - picked
        valid = (t != ignore_label)
        return jnp.sum(jnp.where(valid, ce, 0.0)) / jnp.sum(valid.astype(jnp.float32))

    def _fwd(x):
        ce = _ce(x)
        pt = jnp.exp(-ce)
        fl = jnp.power(1.0 - pt, gamma)
        return alpha * fl if alpha is not None else fl

    balance_weights = [0.4, 1.0]
    if len(balance_weights) == len(score):
        return sum(w * _fwd(x) for w, x in zip(balance_weights, score))
    return 1.0 * _fwd(score[0])


if __name__ == "__main__":
    # Hyperparameters of the module instance (deterministic, in-script).
    GAMMA = 2.0
    ALPHA = 0.25
    IGNORE = -1

    key = jax.random.PRNGKey(0)
    k1, k2, k3, k4, k5, k6, k7 = jax.random.split(key, 7)

    # --- Test 1: module-sized f32 inputs, single and paired predictions. ---
    N, C, H, W = 2, 4, 16, 16
    score = jax.random.normal(k1, (N, C, H, W), dtype=jnp.float32)
    target = jax.random.randint(k2, (N, H, W), 0, C, dtype=jnp.int32)
    ignore_mask = jax.random.bernoulli(k3, 0.1, (N, H, W))
    target = jnp.where(ignore_mask, IGNORE, target)

    out_single = focal_loss(score, target, gamma=GAMMA, alpha=ALPHA,
                            ignore_label=IGNORE)
    score2 = jax.random.normal(k4, (N, C, H, W), dtype=jnp.float32)
    out_pair = focal_loss([score, score2], target, gamma=GAMMA, alpha=ALPHA,
                          ignore_label=IGNORE)
    out_single = jax.block_until_ready(out_single)
    out_pair = jax.block_until_ready(out_pair)

    ref_single = _reference_focal_loss(score, target, gamma=GAMMA, alpha=ALPHA,
                                       ignore_label=IGNORE)
    ref_pair = _reference_focal_loss([score, score2], target, gamma=GAMMA,
                                     alpha=ALPHA, ignore_label=IGNORE)
    assert jnp.allclose(out_single, ref_single, rtol=1e-5, atol=1e-6), \
        (out_single, ref_single)
    assert jnp.allclose(out_pair, ref_pair, rtol=1e-5, atol=1e-6), \
        (out_pair, ref_pair)

    # --- Test 2: bf16 scores + int8 targets, 19 classes; exercises the
    # megacore pixel-chunk axis, ragged-tail masking and narrow dtypes. ---
    N2, C2, H2, W2 = 1, 19, 96, 96
    score_b = jax.random.normal(k5, (N2, C2, H2, W2), dtype=jnp.bfloat16)
    target_b = jax.random.randint(k6, (N2, H2, W2), 0, C2, dtype=jnp.int8)
    ignore_b = jax.random.bernoulli(k7, 0.1, (N2, H2, W2))
    target_b = jnp.where(ignore_b, jnp.int8(IGNORE), target_b)

    out_big = focal_loss(score_b, target_b, gamma=GAMMA, alpha=None,
                         ignore_label=IGNORE, max_rows=32)
    out_big = jax.block_until_ready(out_big)
    ref_big = _reference_focal_loss(score_b, target_b, gamma=GAMMA, alpha=None,
                                    ignore_label=IGNORE)
    assert jnp.allclose(out_big, ref_big, rtol=1e-4, atol=1e-5), \
        (out_big, ref_big)

    print("KERNEL_OK")
</pallas_src>

<mosaic_0001>
module attributes {stable_mosaic.version = 11 : i64} {
  func.func @_focal_ce_kernel(%arg0: i32, %arg1: i32, %arg2: i32, %arg3: memref<1x4x8x128xf32, #tpu.memory_space<vmem>>, %arg4: memref<1x1x8x128xi32, #tpu.memory_space<vmem>>, %arg5: memref<1x1x8x128xf32, #tpu.memory_space<vmem>>, %arg6: memref<1x1x8x128xf32, #tpu.memory_space<vmem>>) attributes {dimension_semantics = [#tpu.dimension_semantics<parallel>, #tpu.dimension_semantics<parallel>, #tpu.dimension_semantics<arbitrary>], iteration_bounds = array<i64: 2, 1, 1>, scalar_prefetch = 0 : i64, scratch_operands = 0 : i64, tpu.core_type = #tpu.core_type<tc>, window_params = [{transform_indices = @transform_0, window_bounds = array<i64: 1, 4, 8, 128>}, {transform_indices = @transform_1, window_bounds = array<i64: 1, 1, 8, 128>}, {transform_indices = @transform_2, window_bounds = array<i64: 1, 1, 8, 128>}, {transform_indices = @transform_3, window_bounds = array<i64: 1, 1, 8, 128>}]} {
    %c0_i32 = arith.constant 0 : i32
    %0 = arith.cmpi eq, %arg2, %c0_i32 : i32
    %1 = arith.extui %0 : i1 to i32
    %c0_i32_0 = arith.constant 0 : i32
    %2 = arith.cmpi ne, %1, %c0_i32_0 : i32
    scf.if %2 {
      %cst_59 = arith.constant 0.000000e+00 : f32
      %89 = vector.broadcast %cst_59 : f32 to vector<1x1x8x128xf32>
      %c0_60 = arith.constant 0 : index
      %c0_61 = arith.constant 0 : index
      %c0_62 = arith.constant 0 : index
      %c0_63 = arith.constant 0 : index
      %90 = vector.load %arg5[%c0_60, %c0_61, %c0_62, %c0_63] : memref<1x1x8x128xf32, #tpu.memory_space<vmem>>, vector<1x1x8x128xf32>
      tpu.vector_store %arg5[%c0_60, %c0_61, %c0_62, %c0_63], %89 {strides = array<i32>} : memref<1x1x8x128xf32, #tpu.memory_space<vmem>>, vector<1x1x8x128xf32>,
      %cst_64 = arith.constant 0.000000e+00 : f32
      %91 = vector.broadcast %cst_64 : f32 to vector<1x1x8x128xf32>
      %c0_65 = arith.constant 0 : index
      %c0_66 = arith.constant 0 : index
      %c0_67 = arith.constant 0 : index
      %c0_68 = arith.constant 0 : index
      %92 = vector.load %arg6[%c0_65, %c0_66, %c0_67, %c0_68] : memref<1x1x8x128xf32, #tpu.memory_space<vmem>>, vector<1x1x8x128xf32>
      tpu.vector_store %arg6[%c0_65, %c0_66, %c0_67, %c0_68], %91 {strides = array<i32>} : memref<1x1x8x128xf32, #tpu.memory_space<vmem>>, vector<1x1x8x128xf32>,
    } else {
    }
    %c0 = arith.constant 0 : index
    %c0_1 = arith.constant 0 : index
    %c0_2 = arith.constant 0 : index
    %c0_3 = arith.constant 0 : index
    %3 = vector.load %arg4[%c0, %c0_1, %c0_2, %c0_3] : memref<1x1x8x128xi32, #tpu.memory_space<vmem>>, vector<1x1x8x128xi32>
    %4 = vector.shape_cast %3 : vector<1x1x8x128xi32> to vector<8x128xi32>
    %5 = tpu.iota {dimensions = array<i32: 0>} : vector<8x128xi32>
    %6 = tpu.iota {dimensions = array<i32: 1>} : vector<8x128xi32>
    %c1_i32 = arith.constant 1 : i32
    %7 = arith.muli %arg1, %c1_i32 : i32
    %8 = arith.addi %7, %arg2 : i32
    %c8_i32 = arith.constant 8 : i32
    %9 = arith.muli %8, %c8_i32 : i32
    %10 = vector.broadcast %9 : i32 to vector<8x128xi32>
    %11 = arith.addi %10, %5 : vector<8x128xi32>
    %c128_i32 = arith.constant 128 : i32
    %12 = vector.broadcast %c128_i32 : i32 to vector<8x128xi32>
    %13 = arith.muli %11, %12 : vector<8x128xi32>
    %14 = arith.addi %13, %6 : vector<8x128xi32>
    %c256_i32 = arith.constant 256 : i32
    %15 = vector.broadcast %c256_i32 : i32 to vector<8x128xi32>
    %16 = arith.cmpi slt, %14, %15 : vector<8x128xi32>
    %c-1_i32 = arith.constant -1 : i32
    %17 = vector.broadcast %c-1_i32 : i32 to vector<8x128xi32>
    %18 = arith.cmpi ne, %4, %17 : vector<8x128xi32>
    %19 = arith.andi %16, %18 : vector<8x128xi1>
    %c0_4 = arith.constant 0 : index
    %c0_5 = arith.constant 0 : index
    %c0_6 = arith.constant 0 : index
    %c0_7 = arith.constant 0 : index
    %20 = vector.load %arg3[%c0_4, %c0_5, %c0_6, %c0_7] : memref<1x4x8x128xf32, #tpu.memory_space<vmem>>, vector<1x1x8x128xf32>
    %21 = vector.shape_cast %20 : vector<1x1x8x128xf32> to vector<8x128xf32>
    %c0_8 = arith.constant 0 : index
    %c1 = arith.constant 1 : index
    %c0_9 = arith.constant 0 : index
    %c0_10 = arith.constant 0 : index
    %22 = vector.load %arg3[%c0_8, %c1, %c0_9, %c0_10] : memref<1x4x8x128xf32, #tpu.memory_space<vmem>>, vector<1x1x8x128xf32>
    %23 = vector.shape_cast %22 : vector<1x1x8x128xf32> to vector<8x128xf32>
    %24 = arith.maximumf %21, %23 : vector<8x128xf32>
    %c0_11 = arith.constant 0 : index
    %c2 = arith.constant 2 : index
    %c0_12 = arith.constant 0 : index
    %c0_13 = arith.constant 0 : index
    %25 = vector.load %arg3[%c0_11, %c2, %c0_12, %c0_13] : memref<1x4x8x128xf32, #tpu.memory_space<vmem>>, vector<1x1x8x128xf32>
    %26 = vector.shape_cast %25 : vector<1x1x8x128xf32> to vector<8x128xf32>
    %27 = arith.maximumf %24, %26 : vector<8x128xf32>
    %c0_14 = arith.constant 0 : index
    %c3 = arith.constant 3 : index
    %c0_15 = arith.constant 0 : index
    %c0_16 = arith.constant 0 : index
    %28 = vector.load %arg3[%c0_14, %c3, %c0_15, %c0_16] : memref<1x4x8x128xf32, #tpu.memory_space<vmem>>, vector<1x1x8x128xf32>
    %29 = vector.shape_cast %28 : vector<1x1x8x128xf32> to vector<8x128xf32>
    %30 = arith.maximumf %27, %29 : vector<8x128xf32>
    %cst = arith.constant 0.000000e+00 : f32
    %31 = vector.broadcast %cst : f32 to vector<8x128xf32>
    %cst_17 = arith.constant 0.000000e+00 : f32
    %32 = vector.broadcast %cst_17 : f32 to vector<8x128xf32>
    %c0_18 = arith.constant 0 : index
    %c0_19 = arith.constant 0 : index
    %c0_20 = arith.constant 0 : index
    %c0_21 = arith.constant 0 : index
    %33 = vector.load %arg3[%c0_18, %c0_19, %c0_20, %c0_21] : memref<1x4x8x128xf32, #tpu.memory_space<vmem>>, vector<1x1x8x128xf32>
    %34 = vector.shape_cast %33 : vector<1x1x8x128xf32> to vector<8x128xf32>
    %35 = arith.subf %34, %30 : vector<8x128xf32>
    %36 = math.exp %35 : vector<8x128xf32>
    %37 = arith.addf %31, %36 : vector<8x128xf32>
    %c0_i32_22 = arith.constant 0 : i32
    %38 = vector.broadcast %c0_i32_22 : i32 to vector<8x128xi32>
    %39 = arith.cmpi eq, %4, %38 : vector<8x128xi32>
    %cst_23 = arith.constant 0.000000e+00 : f32
    %40 = vector.broadcast %cst_23 : f32 to vector<8x128xf32>
    %41 = arith.select %39, %34, %40 : vector<8x128xi1>, vector<8x128xf32>
    %42 = arith.addf %32, %41 : vector<8x128xf32>
    %c0_24 = arith.constant 0 : index
    %c1_25 = arith.constant 1 : index
    %c0_26 = arith.constant 0 : index
    %c0_27 = arith.constant 0 : index
    %43 = vector.load %arg3[%c0_24, %c1_25, %c0_26, %c0_27] : memref<1x4x8x128xf32, #tpu.memory_space<vmem>>, vector<1x1x8x128xf32>
    %44 = vector.shape_cast %43 : vector<1x1x8x128xf32> to vector<8x128xf32>
    %45 = arith.subf %44, %30 : vector<8x128xf32>
    %46 = math.exp %45 : vector<8x128xf32>
    %47 = arith.addf %37, %46 : vector<8x128xf32>
    %c1_i32_28 = arith.constant 1 : i32
    %48 = vector.broadcast %c1_i32_28 : i32 to vector<8x128xi32>
    %49 = arith.cmpi eq, %4, %48 : vector<8x128xi32>
    %cst_29 = arith.constant 0.000000e+00 : f32
    %50 = vector.broadcast %cst_29 : f32 to vector<8x128xf32>
    %51 = arith.select %49, %44, %50 : vector<8x128xi1>, vector<8x128xf32>
    %52 = arith.addf %42, %51 : vector<8x128xf32>
    %c0_30 = arith.constant 0 : index
    %c2_31 = arith.constant 2 : index
    %c0_32 = arith.constant 0 : index
    %c0_33 = arith.constant 0 : index
    %53 = vector.load %arg3[%c0_30, %c2_31, %c0_32, %c0_33] : memref<1x4x8x128xf32, #tpu.memory_space<vmem>>, vector<1x1x8x128xf32>
    %54 = vector.shape_cast %53 : vector<1x1x8x128xf32> to vector<8x128xf32>
    %55 = arith.subf %54, %30 : vector<8x128xf32>
    %56 = math.exp %55 : vector<8x128xf32>
    %57 = arith.addf %47, %56 : vector<8x128xf32>
    %c2_i32 = arith.constant 2 : i32
    %58 = vector.broadcast %c2_i32 : i32 to vector<8x128xi32>
    %59 = arith.cmpi eq, %4, %58 : vector<8x128xi32>
    %cst_34 = arith.constant 0.000000e+00 : f32
    %60 = vector.broadcast %cst_34 : f32 to vector<8x128xf32>
    %61 = arith.select %59, %54, %60 : vector<8x128xi1>, vector<8x128xf32>
    %62 = arith.addf %52, %61 : vector<8x128xf32>
    %c0_35 = arith.constant 0 : index
    %c3_36 = arith.constant 3 : index
    %c0_37 = arith.constant 0 : index
    %c0_38 = arith.constant 0 : index
    %63 = vector.load %arg3[%c0_35, %c3_36, %c0_37, %c0_38] : memref<1x4x8x128xf32, #tpu.memory_space<vmem>>, vector<1x1x8x128xf32>
    %64 = vector.shape_cast %63 : vector<1x1x8x128xf32> to vector<8x128xf32>
    %65 = arith.subf %64, %30 : vector<8x128xf32>
    %66 = math.exp %65 : vector<8x128xf32>
    %67 = arith.addf %57, %66 : vector<8x128xf32>
    %c3_i32 = arith.constant 3 : i32
    %68 = vector.broadcast %c3_i32 : i32 to vector<8x128xi32>
    %69 = arith.cmpi eq, %4, %68 : vector<8x128xi32>
    %cst_39 = arith.constant 0.000000e+00 : f32
    %70 = vector.broadcast %cst_39 : f32 to vector<8x128xf32>
    %71 = arith.select %69, %64, %70 : vector<8x128xi1>, vector<8x128xf32>
    %72 = arith.addf %62, %71 : vector<8x128xf32>
    %73 = arith.subf %30, %72 : vector<8x128xf32>
    %74 = math.log %67 : vector<8x128xf32>
    %75 = arith.addf %73, %74 : vector<8x128xf32>
    %cst_40 = arith.constant 0.000000e+00 : f32
    %76 = vector.broadcast %cst_40 : f32 to vector<8x128xf32>
    %77 = arith.select %19, %75, %76 : vector<8x128xi1>, vector<8x128xf32>
    %cst_41 = arith.constant 1.000000e+00 : f32
    %cst_42 = arith.constant 0.000000e+00 : f32
    %78 = vector.broadcast %cst_41 : f32 to vector<8x128xf32>
    %79 = vector.broadcast %cst_42 : f32 to vector<8x128xf32>
    %80 = arith.select %19, %78, %79 : vector<8x128xi1>, vector<8x128xf32>
    %c0_43 = arith.constant 0 : index
    %c0_44 = arith.constant 0 : index
    %c0_45 = arith.constant 0 : index
    %c0_46 = arith.constant 0 : index
    %81 = vector.load %arg5[%c0_43, %c0_44, %c0_45, %c0_46] : memref<1x1x8x128xf32, #tpu.memory_space<vmem>>, vector<1x1x8x128xf32>
    %82 = vector.shape_cast %77 : vector<8x128xf32> to vector<1x1x8x128xf32>
    %83 = arith.addf %81, %82 : vector<1x1x8x128xf32>
    %c0_47 = arith.constant 0 : index
    %c0_48 = arith.constant 0 : index
    %c0_49 = arith.constant 0 : index
    %c0_50 = arith.constant 0 : index
    %84 = vector.load %arg5[%c0_47, %c0_48, %c0_49, %c0_50] : memref<1x1x8x128xf32, #tpu.memory_space<vmem>>, vector<1x1x8x128xf32>
    tpu.vector_store %arg5[%c0_47, %c0_48, %c0_49, %c0_50], %83 {strides = array<i32>} : memref<1x1x8x128xf32, #tpu.memory_space<vmem>>, vector<1x1x8x128xf32>,
    %c0_51 = arith.constant 0 : index
    %c0_52 = arith.constant 0 : index
    %c0_53 = arith.constant 0 : index
    %c0_54 = arith.constant 0 : index
    %85 = vector.load %arg6[%c0_51, %c0_52, %c0_53, %c0_54] : memref<1x1x8x128xf32, #tpu.memory_space<vmem>>, vector<1x1x8x128xf32>
    %86 = vector.shape_cast %80 : vector<8x128xf32> to vector<1x1x8x128xf32>
    %87 = arith.addf %85, %86 : vector<1x1x8x128xf32>
    %c0_55 = arith.constant 0 : index
    %c0_56 = arith.constant 0 : index
    %c0_57 = arith.constant 0 : index
    %c0_58 = arith.constant 0 : index
    %88 = vector.load %arg6[%c0_55, %c0_56, %c0_57, %c0_58] : memref<1x1x8x128xf32, #tpu.memory_space<vmem>>, vector<1x1x8x128xf32>
    tpu.vector_store %arg6[%c0_55, %c0_56, %c0_57, %c0_58], %87 {strides = array<i32>} : memref<1x1x8x128xf32, #tpu.memory_space<vmem>>, vector<1x1x8x128xf32>,
    return
  }
  func.func @transform_0(%arg0: i32, %arg1: i32, %arg2: i32) -> (i32, i32, i32, i32) {
    %c1_i32 = arith.constant 1 : i32
    %0 = arith.muli %arg1, %c1_i32 : i32
    %1 = arith.addi %0, %arg2 : i32
    %c0_i32 = arith.constant 0 : i32
    %2 = arith.minsi %1, %c0_i32 : i32
    %c0_i32_0 = arith.constant 0 : i32
    %c0_i32_1 = arith.constant 0 : i32
    %c0_i32_2 = arith.constant 0 : i32
    return %arg0, %c0_i32_0, %2, %c0_i32_1 : i32, i32, i32, i32
  }
  func.func @transform_1(%arg0: i32, %arg1: i32, %arg2: i32) -> (i32, i32, i32, i32) {
    %c1_i32 = arith.constant 1 : i32
    %0 = arith.muli %arg1, %c1_i32 : i32
    %1 = arith.addi %0, %arg2 : i32
    %c0_i32 = arith.constant 0 : i32
    %2 = arith.minsi %1, %c0_i32 : i32
    %c0_i32_0 = arith.constant 0 : i32
    %c0_i32_1 = arith.constant 0 : i32
    %c0_i32_2 = arith.constant 0 : i32
    return %arg0, %c0_i32_0, %2, %c0_i32_1 : i32, i32, i32, i32
  }
  func.func @transform_2(%arg0: i32, %arg1: i32, %arg2: i32) -> (i32, i32, i32, i32) {
    %c0_i32 = arith.constant 0 : i32
    %c0_i32_0 = arith.constant 0 : i32
    %c0_i32_1 = arith.constant 0 : i32
    return %arg0, %arg1, %c0_i32, %c0_i32_0 : i32, i32, i32, i32
  }
  func.func @transform_3(%arg0: i32, %arg1: i32, %arg2: i32) -> (i32, i32, i32, i32) {
    %c0_i32 = arith.constant 0 : i32
    %c0_i32_0 = arith.constant 0 : i32
    %c0_i32_1 = arith.constant 0 : i32
    return %arg0, %arg1, %c0_i32, %c0_i32_0 : i32, i32, i32, i32
  }
}

</mosaic_0001>

<llo_original>
// kernel: tpu_custom_call.1
$region0: #{tpu_custom_call.1}
  #allocation0 [shape = 'u32[]', space=smem, size = 0x4, offset = 0x4, fixed_abs, tag = 'smem constant byte address 0x4 - core index']
  #allocation1 [shape = 'u32[144,128]{1,0:T(1,128)}', space=vmem, size = 0x12000, scoped, tag = 'internal scratch']
  %s0 = inlined_call_operand.hbm [shape: f32[2,4,8,128], index: 0, kind: input, shape index: {}]
  %s1 = inlined_call_operand.hbm [shape: s32[2,1,8,128], index: 1, kind: input, shape index: {}]
  %s2 = inlined_call_operand.hbm [shape: f32[2,1,8,128], index: 2, kind: output, shape index: {0}]
  %s3 = inlined_call_operand.hbm [shape: f32[2,1,8,128], index: 3, kind: output, shape index: {1}]
  %4 = xla_tuple %s2, %s3
  %s5 = sld [smem:[#allocation0]]
  $region61: #{tpu_custom_call.1} parent=0
    _
  %s7 = ssub.s32 1, %s5
  %s8 = scalar_select 0, %s7, %s5
  $region1: #{tpu_custom_call.1} parent=0
    #allocation2 [shape = 'u8[32768]{0}', space=vmem, size = 0x8000, scoped, tag = 'input window, operand 0']
    #allocation3 [shape = 's32[2]{0}', space=sflag, size = 0x8, scoped, tag = 'scoped memory for tpu_custom_call.1']
    #allocation4 [shape = 's32[2]{0}', space=sflag, size = 0x8, scoped, tag = 'scoped memory for tpu_custom_call.1']
    #allocation5 [shape = 'u8[8192]{0}', space=vmem, size = 0x2000, scoped, tag = 'input window, operand 1']
    #allocation6 [shape = 's32[2]{0}', space=sflag, size = 0x8, scoped, tag = 'scoped memory for tpu_custom_call.1']
    #allocation7 [shape = 'u8[8192]{0}', space=vmem, size = 0x2000, scoped, tag = 'output window, operand 0']
    #allocation8 [shape = 'u8[8192]{0}', space=vmem, size = 0x2000, scoped, tag = 'output window, operand 1']
    #allocation9 [shape = 's32[2]{0}', space=sflag, size = 0x8, scoped, tag = 'scoped memory for tpu_custom_call.1']
    %9 = vsyncpa [#allocation3], 0
    %s10 = scalar_lea.sflag [#allocation3], 1
    %11 = vsyncpa %s10, 0
    %12 = vsyncpa [#allocation6], 0
    %s13 = scalar_lea.sflag [#allocation6], 1
    %14 = vsyncpa %s13, 0
    %15 = vsyncpa [#allocation4], 0
    %s16 = scalar_lea.sflag [#allocation4], 1
    %17 = vsyncpa %s16, 0
    %18 = vsyncpa [#allocation9], 0
    %s19 = scalar_lea.sflag [#allocation9], 1
    %20 = vsyncpa %s19, 0
    loop: start=0, step=1, limit=4
    $region2: #{tpu_custom_call.1} parent=1 // loop_pre_header
      _
    $region3: #{tpu_custom_call.1} parent=1 // loop_header
      %s22 = sphi 0, %s26
      %p23 = scmp.ge.s32.totalorder %s22, 4
      %s29 = sphi 0, %s48
      %s30 = sphi 0, %s44
      %s31 = sphi 0, %s40
      %s32 = sphi 0, %s29
      %s33 = sphi 0, %s30
      %s34 = sphi 0, %s31
      %s35 = sphi 0, %s32
      %s36 = sphi 0, %s33
      %s37 = sphi 0, %s34
      %s59 = sphi 0, %s61
      %s62 = sphi 0, %s59
      %s63 = sphi 0, %s62
      %s79 = sphi 0, %s63
      %s93 = sphi 0, %s95
      %s96 = sphi 0, %s93
      %s97 = sphi 0, %s96
      %s113 = sphi 0, %s97
      %s121 = sphi 0, %s123
      %s124 = sphi 0, %s121
      %s125 = sphi 0, %s124
      %s141 = sphi 0, %s125
      %s149 = sphi 0, %s151
      %s152 = sphi 0, %s149
      %s153 = sphi 0, %s152
      %s169 = sphi 0, %s153
    $region4: #{tpu_custom_call.1} parent=1 // loop_header_branch
      %25 = sbr.rel (%p23) target = $region8
    $region5: #{tpu_custom_call.1} parent=1 // loop_body
      %s27 = ssub.s32 %s22, 1
      %s28 = ssub.s32 %s22, 2
      %s38 = sadd.s32 1, %s31
      %p39 = scmp.ge.s32.totalorder %s38, 1
      %s40 = scalar_select %p39, 0, %s38
      %s41 = sadd.s32 1, %s30
      %s42 = scalar_select %p39, %s41, %s30
      %p43 = scmp.ge.s32.totalorder %s42, 1
      %s44 = scalar_select %p43, 0, %s42
      %s45 = sadd.s32 1, %s29
      %s46 = scalar_select %p43, %s45, %s29
      %p47 = scmp.ge.s32.totalorder %s46, 2
      %s48 = scalar_select %p47, 0, %s46
      %s49 = sadd.s32 %s30, %s31
      %p50 = scmp.lt.s32.totalorder %s49, 0
      %s51 = scalar_select %p50, %s49, 0
      %s52 = sadd.s32 %s44, %s40
      %p53 = scmp.lt.s32.totalorder %s52, 0
      %s54 = scalar_select %p53, %s52, 0
      %s55 = ssub.s32 %s29, %s48
      %s56 = ssub.s32 %s51, %s54
      %s57 = sor.u32 %s55, %s56
      %p58 = scmp.eq.s32.totalorder %s57, 0
      %s60 = sadd.s32 %s59, 1
      %s61 = scalar_select %p58, %s59, %s60
      %p64 = pneg %p58
      %p65 = scmp.eq.s32.totalorder %s22, 1
      %p66 = por %p64, %p65
      %p67 = scmp.ne.s32.totalorder %s59, %s62
      %p68 = scmp.eq.s32.totalorder %s22, 0
      %p69 = por %p67, %p68
      %p70 = scmp.ne.s32.totalorder %s59, %s62
      %p71 = scmp.eq.s32.totalorder %s27, 1
      %p72 = por %p70, %p71
      %p73 = scmp.ne.s32.totalorder %s62, %s63
      %p74 = scmp.eq.s32.totalorder %s27, 0
      %p75 = por %p73, %p74
      %p76 = scmp.ne.s32.totalorder %s62, %s63
      %p77 = scmp.eq.s32.totalorder %s28, 1
      %p78 = por %p76, %p77
      %p80 = scmp.ne.s32.totalorder %s63, %s79
      %p81 = scmp.eq.s32.totalorder %s28, 0
      %p82 = por %p80, %p81
      %s83 = sadd.s32 %s30, %s31
      %p84 = scmp.lt.s32.totalorder %s83, 0
      %s85 = scalar_select %p84, %s83, 0
      %s86 = sadd.s32 %s44, %s40
      %p87 = scmp.lt.s32.totalorder %s86, 0
      %s88 = scalar_select %p87, %s86, 0
      %s89 = ssub.s32 %s29, %s48
      %s90 = ssub.s32 %s85, %s88
      %s91 = sor.u32 %s89, %s90
      %p92 = scmp.eq.s32.totalorder %s91, 0
      %s94 = sadd.s32 %s93, 1
      %s95 = scalar_select %p92, %s93, %s94
      %p98 = pneg %p92
      %p99 = scmp.eq.s32.totalorder %s22, 1
      %p100 = por %p98, %p99
      %p101 = scmp.ne.s32.totalorder %s93, %s96
      %p102 = scmp.eq.s32.totalorder %s22, 0
      %p103 = por %p101, %p102
      %p104 = scmp.ne.s32.totalorder %s93, %s96
      %p105 = scmp.eq.s32.totalorder %s27, 1
      %p106 = por %p104, %p105
      %p107 = scmp.ne.s32.totalorder %s96, %s97
      %p108 = scmp.eq.s32.totalorder %s27, 0
      %p109 = por %p107, %p108
      %p110 = scmp.ne.s32.totalorder %s96, %s97
      %p111 = scmp.eq.s32.totalorder %s28, 1
      %p112 = por %p110, %p111
      %p114 = scmp.ne.s32.totalorder %s97, %s113
      %p115 = scmp.eq.s32.totalorder %s28, 0
      %p116 = por %p114, %p115
      %s117 = ssub.s32 %s29, %s48
      %s118 = ssub.s32 %s30, %s44
      %s119 = sor.u32 %s117, %s118
      %p120 = scmp.eq.s32.totalorder %s119, 0
      %s122 = sadd.s32 %s121, 1
      %s123 = scalar_select %p120, %s121, %s122
      %p126 = pneg %p120
      %p127 = scmp.eq.s32.totalorder %s22, 1
      %p128 = por %p126, %p127
      %p129 = scmp.ne.s32.totalorder %s121, %s124
      %p130 = scmp.eq.s32.totalorder %s22, 0
      %p131 = por %p129, %p130
      %p132 = scmp.ne.s32.totalorder %s121, %s124
      %p133 = scmp.eq.s32.totalorder %s27, 1
      %p134 = por %p132, %p133
      %p135 = scmp.ne.s32.totalorder %s124, %s125
      %p136 = scmp.eq.s32.totalorder %s27, 0
      %p137 = por %p135, %p136
      %p138 = scmp.ne.s32.totalorder %s124, %s125
      %p139 = scmp.eq.s32.totalorder %s28, 1
      %p140 = por %p138, %p139
      %p142 = scmp.ne.s32.totalorder %s125, %s141
      %p143 = scmp.eq.s32.totalorder %s28, 0
      %p144 = por %p142, %p143
      %s145 = ssub.s32 %s29, %s48
      %s146 = ssub.s32 %s30, %s44
      %s147 = sor.u32 %s145, %s146
      %p148 = scmp.eq.s32.totalorder %s147, 0
      %s150 = sadd.s32 %s149, 1
      %s151 = scalar_select %p148, %s149, %s150
      %p154 = pneg %p148
      %p155 = scmp.eq.s32.totalorder %s22, 1
      %p156 = por %p154, %p155
      %p157 = scmp.ne.s32.totalorder %s149, %s152
      %p158 = scmp.eq.s32.totalorder %s22, 0
      %p159 = por %p157, %p158
      %p160 = scmp.ne.s32.totalorder %s149, %s152
      %p161 = scmp.eq.s32.totalorder %s27, 1
      %p162 = por %p160, %p161
      %p163 = scmp.ne.s32.totalorder %s152, %s153
      %p164 = scmp.eq.s32.totalorder %s27, 0
      %p165 = por %p163, %p164
      %p166 = scmp.ne.s32.totalorder %s152, %s153
      %p167 = scmp.eq.s32.totalorder %s28, 1
      %p168 = por %p166, %p167
      %p170 = scmp.ne.s32.totalorder %s153, %s169
      %p171 = scmp.eq.s32.totalorder %s28, 0
      %p172 = por %p170, %p171
      %p173 = scmp.le.s32.totalorder 1, %s22
      %p174 = scmp.lt.s32.totalorder %s22, 3
      %p175 = pnand %p173, %p174
      %p176 = pneg %p175
      // Predicated region
      $region9: #{tpu_custom_call.1} parent=5 // pred_check
        _
      $region10: #{tpu_custom_call.1} parent=5 // pred_check_branch
        %178 = sbr.rel (%p175) target = $region12
      $region11: #{tpu_custom_call.1} parent=5 // pred_region
        %s179 = ssub.s32 %s22, 1
      $region12: #{tpu_custom_call.1} parent=5 // pred_fallthru
        _
      %p180 = scmp.lt.s32.totalorder %s22, 2
      // Predicated region
      $region13: #{tpu_custom_call.1} parent=5 // pred_check
        %p181 = pneg %p180
      $region14: #{tpu_custom_call.1} parent=5 // pred_check_branch
        %183 = sbr.rel (%p181) target = $region16
      $region15: #{tpu_custom_call.1} parent=5 // pred_region
        // Predicated region
        $region17: #{tpu_custom_call.1} parent=15 // pred_check
          %p184 = pneg %p69
        $region18: #{tpu_custom_call.1} parent=15 // pred_check_branch
          %186 = sbr.rel (%p184) target = $region20
        $region19: #{tpu_custom_call.1} parent=15 // pred_region
          %s187 = sand.u32 %s59, 1
          %s188 = scalar_lea.sflag [#allocation3], %s187
          %s189 = sand.u32 %s59, 1
          %s190 = smul.addr %s189, 32
          %s191 = scalar_lea.vmem [#allocation2], %s190
          %s192 = sadd.s32 %s30, %s31
          %p193 = scmp.lt.s32.totalorder %s192, 0
          %s194 = scalar_select %p193, %s192, 0
          %s196 = ssub.s32 512, 512
          %197 = vsyncadd %s188, %s196
          %s198 = smul.addr %s29, 4
          %s199 = sadd.s32 %s194, %s198
          %s200 = smul.addr %s199, 128
          %s201 = scalar_lea.hbm %s0, %s200
          %s202 = sshll.u32 %s191, 4
          %s203 = int_to_ptr.vmem [resolvable:$true] %s202
          %208 = dma.hbm_to_vmem [thread:$0]  %s201, 512, %s203, %s188, 128, 128, 8
        $region20: #{tpu_custom_call.1} parent=15 // pred_fallthru
          _
        // Predicated region
        $region21: #{tpu_custom_call.1} parent=15 // pred_check
          %p209 = pneg %p103
        $region22: #{tpu_custom_call.1} parent=15 // pred_check_branch
          %211 = sbr.rel (%p209) target = $region24
        $region23: #{tpu_custom_call.1} parent=15 // pred_region
          %s212 = sand.u32 %s93, 1
          %s213 = scalar_lea.sflag [#allocation6], %s212
          %s214 = sand.u32 %s93, 1
          %s215 = smul.addr %s214, 8
          %s216 = scalar_lea.vmem [#allocation5], %s215
          %s217 = sadd.s32 %s30, %s31
          %p218 = scmp.lt.s32.totalorder %s217, 0
          %s219 = scalar_select %p218, %s217, 0
          %s221 = ssub.s32 128, 128
          %222 = vsyncadd %s213, %s221
          %s223 = sadd.s32 %s219, %s29
          %s224 = smul.addr %s223, 128
          %s225 = scalar_lea.hbm %s1, %s224
          %s227 = sshll.u32 %s216, 4
          %s228 = int_to_ptr.vmem [resolvable:$true] %s227
          %230 = dma.hbm_to_vmem [thread:$0]  %s225, 128, %s228, %s213
        $region24: #{tpu_custom_call.1} parent=15 // pred_fallthru
          _
      $region16: #{tpu_custom_call.1} parent=5 // pred_fallthru
        _
      %p231 = scmp.le.s32.totalorder 1, %s22
      %p232 = scmp.lt.s32.totalorder %s22, 3
      %p233 = pnand %p231, %p232
      %p234 = pneg %p233
      // Predicated region
      $region25: #{tpu_custom_call.1} parent=5 // pred_check
        _
      $region26: #{tpu_custom_call.1} parent=5 // pred_check_branch
        %236 = sbr.rel (%p233) target = $region28
      $region27: #{tpu_custom_call.1} parent=5 // pred_region
        %s237 = ssub.s32 %s22, 1
        %s238 = sand.u32 %s62, 1
        %s239 = scalar_lea.sflag [#allocation3], %s238
        %s240 = sand.u32 %s62, 1
        %s241 = smul.addr %s240, 32
        %s242 = scalar_lea.vmem [#allocation2], %s241
        // Predicated region
        $region29: #{tpu_custom_call.1} parent=27 // pred_check
          %p243 = pneg %p75
        $region30: #{tpu_custom_call.1} parent=27 // pred_check_branch
          %245 = sbr.rel (%p243) target = $region32
        $region31: #{tpu_custom_call.1} parent=27 // pred_region
          %246 = dma.done %s239, 512
        $region32: #{tpu_custom_call.1} parent=27 // pred_fallthru
          _
        %s247 = sand.u32 %s96, 1
        %s248 = scalar_lea.sflag [#allocation6], %s247
        %s249 = sand.u32 %s96, 1
        %s250 = smul.addr %s249, 8
        %s251 = scalar_lea.vmem [#allocation5], %s250
        // Predicated region
        $region33: #{tpu_custom_call.1} parent=27 // pred_check
          %p252 = pneg %p109
        $region34: #{tpu_custom_call.1} parent=27 // pred_check_branch
          %254 = sbr.rel (%p252) target = $region36
        $region35: #{tpu_custom_call.1} parent=27 // pred_region
          %255 = dma.done %s248, 128
        $region36: #{tpu_custom_call.1} parent=27 // pred_fallthru
          _
        %s256 = sand.u32 %s62, 1
        %s257 = scalar_lea.sflag [#allocation3], %s256
        %s258 = sand.u32 %s62, 1
        %s259 = smul.addr %s258, 32
        %s260 = scalar_lea.vmem [#allocation2], %s259
        %p261 = pneg %p75
        %p262 = pneg %p72
        %s263 = sand.u32 %s96, 1
        %s264 = scalar_lea.sflag [#allocation6], %s263
        %s265 = sand.u32 %s96, 1
        %s266 = smul.addr %s265, 8
        %s267 = scalar_lea.vmem [#allocation5], %s266
        %p268 = pneg %p109
        %p269 = pneg %p106
        %p270 = pneg %p137
        %p271 = pneg %p134
        %s272 = sand.u32 %s124, 1
        %s273 = scalar_lea.sflag [#allocation4], %s272
        %s274 = sand.u32 %s124, 1
        %s275 = smul.addr %s274, 8
        %s276 = scalar_lea.vmem [#allocation7], %s275
        %p277 = pneg %p165
        %p278 = pneg %p162
        %s279 = sand.u32 %s152, 1
        %s280 = scalar_lea.sflag [#allocation9], %s279
        %s281 = sand.u32 %s152, 1
        %s282 = smul.addr %s281, 8
        %s283 = scalar_lea.vmem [#allocation8], %s282
        %s284 = sadd.s32 %s33, %s34
        %p285 = scmp.lt.s32.totalorder %s284, 0
        %s286 = scalar_select %p285, %s284, 0
        %s287 = sadd.s32 %s33, %s34
        %p288 = scmp.lt.s32.totalorder %s287, 0
        %s289 = scalar_select %p288, %s287, 0
        %p290 = scmp.eq.s32.totalorder %s34, 0
        // Predicated region
        $region37: #{tpu_custom_call.1} parent=27 // pred_check
          %p291 = pneg %p290
        $region38: #{tpu_custom_call.1} parent=27 // pred_check_branch
          %293 = sbr.rel (%p291) target = $region40
        $region39: #{tpu_custom_call.1} parent=27 // pred_region
          %294 = vst [vmem:[%s276] sm:$0xff] 0.0
          %295 = vst [vmem:[%s283] sm:$0xff] 0.0
        $region40: #{tpu_custom_call.1} parent=27 // pred_fallthru
          _
        %v296 = vld [vmem:[%s251] sm:$0xff]
        %v297 = vlaneseq
        %v298 = vshrl.u32 %v297, 7
        %v299 = vlaneseq
        %v300 = vand.u32 %v299, 127
        %s301 = sadd.s32 %s33, %s34
        %s302 = smul.u32 %s301, 8
        %v303 = vstv %s302
        %v304 = vadd.s32 %v303, %v298
        %v305 = vmul.u32 %v304, 128
        %v306 = vadd.s32 %v305, %v300
        %vm307 = vcmp.lt.s32.totalorder %v306, 256
        %vm308 = vcmp.ne.s32.totalorder %v296, 4294967295
        %vm309 = vmand %vm307, %vm308
        %v310 = vld [vmem:[%s242] sm:$0xff]
        %s311 = scalar_lea.vmem %s242, 8 [#allocation2]
        %v312 = vld [vmem:[%s311] sm:$0xff]
        %v313 = vmax.f32 %v310, %v312
        %s314 = scalar_lea.vmem %s242, 16 [#allocation2]
        %v315 = vld [vmem:[%s314] sm:$0xff]
        %v316 = vmax.f32 %v313, %v315
        %s317 = scalar_lea.vmem %s242, 24 [#allocation2]
        %v318 = vld [vmem:[%s317] sm:$0xff]
        %v319 = vmax.f32 %v316, %v318
        %v320 = vsub.f32 %v310, %v319
        %v321 = vmul.f32 %v320, 1.442695
        %v322 = vpow.pop %v321
        %v323 = vadd.f32 %v322, 0.0
        %vm324 = vcmp.eq.s32.totalorder %v296, 0
        %v325 = vsel %vm324, %v310, 0.0
        %v326 = vadd.f32 %v325, 0.0
        %v327 = vsub.f32 %v312, %v319
        %v328 = vmul.f32 %v327, 1.442695
        %v329 = vpow.pop %v328
        %v330 = vadd.f32 %v323, %v329
        %vm331 = vcmp.eq.s32.totalorder %v296, 1
        %v332 = vsel %vm331, %v312, 0.0
        %v333 = vadd.f32 %v326, %v332
        %v334 = vsub.f32 %v315, %v319
        %v335 = vmul.f32 %v334, 1.442695
        %v336 = vpow.pop %v335
        %v337 = vadd.f32 %v330, %v336
        %vm338 = vcmp.eq.s32.totalorder %v296, 2
        %v339 = vsel %vm338, %v315, 0.0
        %v340 = vadd.f32 %v333, %v339
        %v341 = vsub.f32 %v318, %v319
        %v342 = vmul.f32 %v341, 1.442695
        %v343 = vpow.pop %v342
        %v344 = vadd.f32 %v337, %v343
        %vm345 = vcmp.eq.s32.totalorder %v296, 3
        %v346 = vsel %vm345, %v318, 0.0
        %v347 = vadd.f32 %v340, %v346
        %v348 = vsub.f32 %v319, %v347
        %v349 = vlog2.pop %v344
        %v350 = vmul.f32 %v349, 0.6931472
        %v351 = vadd.f32 %v348, %v350
        %v352 = vsel %vm309, %v351, 0.0
        %v353 = vsel %vm309, 1.0, 0.0
        %v354 = vld [vmem:[%s276] sm:$0xff]
        %v355 = vadd.f32 %v354, %v352
        %356 = vst [vmem:[%s276] sm:$0xff] %v355
        %v357 = vld [vmem:[%s283] sm:$0xff]
        %v358 = vadd.f32 %v357, %v353
        %359 = vst [vmem:[%s283] sm:$0xff] %v358
        %s360 = sand.u32 %s124, 1
        %s361 = scalar_lea.sflag [#allocation4], %s360
        %s362 = sand.u32 %s124, 1
        %s363 = smul.addr %s362, 8
        %s364 = scalar_lea.vmem [#allocation7], %s363
        %s365 = sand.u32 %s152, 1
        %s366 = scalar_lea.sflag [#allocation9], %s365
        %s367 = sand.u32 %s152, 1
        %s368 = smul.addr %s367, 8
        %s369 = scalar_lea.vmem [#allocation8], %s368
        // Predicated region
        $region41: #{tpu_custom_call.1} parent=27 // pred_check
          %p370 = pneg %p134
        $region42: #{tpu_custom_call.1} parent=27 // pred_check_branch
          %372 = sbr.rel (%p370) target = $region44
        $region43: #{tpu_custom_call.1} parent=27 // pred_region
          %s374 = ssub.s32 128, 128
          %375 = vsyncadd %s361, %s374
          %s376 = sadd.s32 %s33, %s32
          %s377 = smul.addr %s376, 128
          %s378 = scalar_lea.hbm %s2, %s377
          %s380 = sshll.u32 %s364, 4
          %s381 = int_to_ptr.vmem [resolvable:$true] %s380
          %383 = dma.vmem_to_hbm [thread:$0]  %s381, 128, %s378, %s361
        $region44: #{tpu_custom_call.1} parent=27 // pred_fallthru
          _
        // Predicated region
        $region45: #{tpu_custom_call.1} parent=27 // pred_check
          %p384 = pneg %p162
        $region46: #{tpu_custom_call.1} parent=27 // pred_check_branch
          %386 = sbr.rel (%p384) target = $region48
        $region47: #{tpu_custom_call.1} parent=27 // pred_region
          %s388 = ssub.s32 128, 128
          %389 = vsyncadd %s366, %s388
          %s390 = sadd.s32 %s33, %s32
          %s391 = smul.addr %s390, 128
          %s392 = scalar_lea.hbm %s3, %s391
          %s394 = sshll.u32 %s369, 4
          %s395 = int_to_ptr.vmem [resolvable:$true] %s394
          %397 = dma.vmem_to_hbm [thread:$0]  %s395, 128, %s392, %s366
        $region48: #{tpu_custom_call.1} parent=27 // pred_fallthru
          _
      $region28: #{tpu_custom_call.1} parent=5 // pred_fallthru
        _
      %p398 = scmp.le.s32.totalorder 2, %s22
      // Predicated region
      $region49: #{tpu_custom_call.1} parent=5 // pred_check
        %p399 = pneg %p398
      $region50: #{tpu_custom_call.1} parent=5 // pred_check_branch
        %401 = sbr.rel (%p399) target = $region52
      $region51: #{tpu_custom_call.1} parent=5 // pred_region
        %s402 = ssub.s32 %s22, 2
        // Predicated region
        $region53: #{tpu_custom_call.1} parent=51 // pred_check
          %p403 = pneg %p140
        $region54: #{tpu_custom_call.1} parent=51 // pred_check_branch
          %405 = sbr.rel (%p403) target = $region56
        $region55: #{tpu_custom_call.1} parent=51 // pred_region
          %s406 = sand.u32 %s125, 1
          %s407 = scalar_lea.sflag [#allocation4], %s406
          %s408 = sand.u32 %s125, 1
          %s409 = smul.addr %s408, 8
          %s410 = scalar_lea.vmem [#allocation7], %s409
          %411 = dma.done %s407, 128
        $region56: #{tpu_custom_call.1} parent=51 // pred_fallthru
          _
        // Predicated region
        $region57: #{tpu_custom_call.1} parent=51 // pred_check
          %p412 = pneg %p168
        $region58: #{tpu_custom_call.1} parent=51 // pred_check_branch
          %414 = sbr.rel (%p412) target = $region60
        $region59: #{tpu_custom_call.1} parent=51 // pred_region
          %s415 = sand.u32 %s153, 1
          %s416 = scalar_lea.sflag [#allocation9], %s415
          %s417 = sand.u32 %s153, 1
          %s418 = smul.addr %s417, 8
          %s419 = scalar_lea.vmem [#allocation8], %s418
          %420 = dma.done %s416, 128
        $region60: #{tpu_custom_call.1} parent=51 // pred_fallthru
          _
      $region52: #{tpu_custom_call.1} parent=5 // pred_fallthru
        _
    $region6: #{tpu_custom_call.1} parent=1 // loop_footer
      %s26 = sadd.s32 1, %s22
    $region7: #{tpu_custom_call.1} parent=1 // loop_footer_branch
      %21 = sbr.rel target = $region3
    $region8: #{tpu_custom_call.1} parent=1 // loop_exit
      _
    %421 = vsyncpa [#allocation3], 1
    %s422 = scalar_lea.sflag [#allocation3], 1
    %423 = vsyncpa %s422, 1
    %424 = vsyncpa [#allocation6], 1
    %s425 = scalar_lea.sflag [#allocation6], 1
    %426 = vsyncpa %s425, 1
    %427 = vsyncpa [#allocation4], 1
    %s428 = scalar_lea.sflag [#allocation4], 1
    %429 = vsyncpa %s428, 1
    %430 = vsyncpa [#allocation9], 1
    %s431 = scalar_lea.sflag [#allocation9], 1
    %432 = vsyncpa %s431, 1

</llo_original>
